<compile_context>
chip_gen: v7x
topology: tpu7x:2x2x1
jax: 0.10.0
libtpu: 0.0.40
codegen_flags: <defaults>
</compile_context>

<pallas_src>
import functools

import jax
import jax.numpy as jnp
from jax import lax
from jax.experimental import pallas as pl
from jax.experimental.pallas import tpu as pltpu


_NEG_BIG = -1e30
_TILE_CANDIDATES = (512, 256, 128)


def _round_up(n, m):
    return -(-n // m) * m


def _attn_vmem_bytes(t, C, Cqp, Cv, x_bytes, c_bytes):
    """Rough VMEM working-set estimate for the attention kernel at tile t."""
    b = 0
    b += 2 * Cqp * t * c_bytes          # q tile (double buffered)
    b += 2 * Cqp * t * c_bytes          # k tile
    b += 2 * Cv * t * c_bytes           # augmented v tile
    b += 2 * C * t * x_bytes            # x residual tile
    b += 2 * C * t * x_bytes            # out tile
    b += Cv * t * 4 + 8 * t * 4         # acc + running-max scratch
    b += 3 * t * t * 4                  # s / p / elementwise temporaries
    return int(b * 1.35)                # layout / spill slack


def _vmem_budget():
    phys = 64 * 1024 * 1024             # conservative: v7x per-core VMEM
    try:
        phys = int(pltpu.get_tpu_info().vmem_capacity_bytes)
    except Exception:
        pass
    # Explicit limit: above v5e's 16 MiB / v6e's 32 MiB scoped defaults, but
    # always below v7x's 64 MiB physical, with headroom on 128 MiB parts.
    return min(int(phys * 0.70), 56 * 1024 * 1024)


def _choose_tile(W, C, Cqp, Cv, x_bytes, c_bytes, budget):
    """Pick the shared W tile (TQ == TKV == projection tile) and padded W."""
    if (W <= _TILE_CANDIDATES[0]
            and _attn_vmem_bytes(W, C, Cqp, Cv, x_bytes, c_bytes) <= budget):
        return W, W                     # single full-axis tile, no padding
    fits = [t for t in _TILE_CANDIDATES
            if _attn_vmem_bytes(t, C, Cqp, Cv, x_bytes, c_bytes) <= budget]
    if not fits:
        fits = [_TILE_CANDIDATES[-1]]
    pads = [(_round_up(W, t), t) for t in fits]
    w_pad = min(p for p, _ in pads)
    tile = max(t for p, t in pads if p == w_pad)   # least padding, then largest
    return tile, w_pad


def _proj_kernel(x_ref, w_ref, b_ref, q_ref, k_ref, v_ref, *, cqp):
    """Fused q/k/v 1x1 conv: one (Ctot, C) @ (C, T) matmul per grid step."""
    proj = jnp.dot(w_ref[...], x_ref[...].astype(w_ref.dtype),
                   preferred_element_type=jnp.float32) + b_ref[...]
    q_ref[...] = proj[:cqp, :].astype(q_ref.dtype)
    k_ref[...] = proj[cqp:2 * cqp, :].astype(k_ref.dtype)
    v_ref[...] = proj[2 * cqp:, :].astype(v_ref.dtype)     # includes ones row


def _attn_kernel(q_ref, k_ref, v_ref, x_ref, gamma_ref, o_ref, m_scr, acc_scr,
                 *, C, W, needs_mask, exp_dtype, approx_recip):
    kv = pl.program_id(2)

    @pl.when(kv == 0)
    def _init():
        m_scr[...] = jnp.full_like(m_scr, -jnp.inf)
        acc_scr[...] = jnp.zeros_like(acc_scr)

    q = q_ref[...]                                          # (Cqp, TQ)
    k = k_ref[...]                                          # (Cqp, TKV)
    # energy^T: s[j, i] = sum_c k[c, j] * q[c, i] -> (TKV, TQ).
    # (0,0)-contracted form: loop-invariant q is the stationary RHS; no
    # per-kv-step XLU transpose is introduced.
    s = lax.dot_general(k, q, (((0,), (0,)), ((), ())),
                        preferred_element_type=jnp.float32)

    if needs_mask:
        tkv = k.shape[1]
        col = lax.broadcasted_iota(jnp.int32, (tkv, 1), 0) + kv * tkv
        s = jnp.where(col < W, s, _NEG_BIG)                 # mask padded keys

    m_prev = m_scr[...]                                     # (1, TQ)
    m_new = jnp.maximum(m_prev, jnp.max(s, axis=0, keepdims=True))
    alpha = jnp.exp(m_prev - m_new)                         # (1, TQ) f32
    p = jnp.exp((s - m_new).astype(exp_dtype))              # (TKV, TQ)
    # v is augmented with an all-ones row: this matmul also accumulates
    # sum(p) (softmax denominator) into acc row C -- no separate reduction.
    acc_scr[...] = alpha * acc_scr[...] + jnp.dot(
        v_ref[...], p.astype(v_ref.dtype), preferred_element_type=jnp.float32)
    m_scr[...] = m_new

    @pl.when(kv == pl.num_programs(2) - 1)
    def _finalize():
        acc = acc_scr[...]                                  # (Cv, TQ) f32
        inv_l = pl.reciprocal(acc[C:C + 1, :], approx=approx_recip)
        out = acc[:C, :] * inv_l
        o_ref[...] = (gamma_ref[0] * out
                      + x_ref[...].astype(jnp.float32)).astype(o_ref.dtype)


def self_attn_pallas(x, wq, bq, wk, bk, wv, bv, gamma, *,
                     compute_dtype=jnp.bfloat16, approx_reciprocal=None):
    """x: (B, C, W). wq/wk: (C//8, C), wv: (C, C). Returns gamma*attn(x) + x."""
    B, C, W = x.shape
    Cq = wq.shape[0]
    if approx_reciprocal is None:
        approx_reciprocal = compute_dtype != jnp.float32

    c_bytes = jnp.dtype(compute_dtype).itemsize
    x_bytes = x.dtype.itemsize

    # q/k channel dim padded to a multiple of 16 (f32 & bf16 sublane alignment,
    # aligned static slices of the fused projection).  Padded rows are zero.
    Cqp = _round_up(max(Cq, 1), 16)
    # v augmented with one all-ones row (denominator via the PV matmul) plus
    # zero rows up to a sublane multiple.
    Cv = _round_up(C + 1, 8)
    Ctot = 2 * Cqp + Cv

    vmem_limit = _vmem_budget()
    T, W_pad = _choose_tile(W, C, Cqp, Cv, x_bytes, c_bytes, vmem_limit)
    needs_mask = W_pad != W
    nw = W_pad // T

    # ---- fused projection weights ------------------------------------------
    wq_p = jnp.pad(wq, ((0, Cqp - Cq), (0, 0)))
    wk_p = jnp.pad(wk, ((0, Cqp - Cq), (0, 0)))
    wv_p = jnp.pad(wv, ((0, Cv - C), (0, 0)))
    bq_p = jnp.pad(bq, ((0, Cqp - Cq),))
    bk_p = jnp.pad(bk, ((0, Cqp - Cq),))
    bv_p = jnp.concatenate(
        [bv, jnp.ones((1,), bv.dtype), jnp.zeros((Cv - C - 1,), bv.dtype)])
    w_fused = jnp.concatenate([wq_p, wk_p, wv_p], axis=0).astype(compute_dtype)
    b_fused = jnp.concatenate([bq_p, bk_p, bv_p]).reshape(Ctot, 1).astype(jnp.float32)
    gamma1 = gamma.reshape(1).astype(jnp.float32)

    x_p = jnp.pad(x, ((0, 0), (0, 0), (0, W_pad - W))) if needs_mask else x

    x_total_bytes = B * C * W_pad * x_bytes
    qkv_total_bytes = B * W_pad * (2 * Cqp + Cv) * c_bytes

    # ---- kernel 1: fused q/k/v projection (each x position touched once) ----
    proj_cost = pl.CostEstimate(
        flops=2 * B * W_pad * Ctot * C,
        transcendentals=0,
        bytes_accessed=int(x_total_bytes + Ctot * C * c_bytes + Ctot * 4
                           + qkv_total_bytes))
    const = lambda b, wi: (0, 0)
    q_all, k_all, v_all = pl.pallas_call(
        functools.partial(_proj_kernel, cqp=Cqp),
        out_shape=(jax.ShapeDtypeStruct((B, Cqp, W_pad), compute_dtype),
                   jax.ShapeDtypeStruct((B, Cqp, W_pad), compute_dtype),
                   jax.ShapeDtypeStruct((B, Cv, W_pad), compute_dtype)),
        grid=(B, nw),
        in_specs=[
            pl.BlockSpec((None, C, T), lambda b, wi: (b, 0, wi)),   # x tile
            pl.BlockSpec((Ctot, C), const),                          # fused W
            pl.BlockSpec((Ctot, 1), const),                          # fused bias
        ],
        out_specs=(
            pl.BlockSpec((None, Cqp, T), lambda b, wi: (b, 0, wi)),  # q
            pl.BlockSpec((None, Cqp, T), lambda b, wi: (b, 0, wi)),  # k
            pl.BlockSpec((None, Cv, T), lambda b, wi: (b, 0, wi)),   # v (augmented)
        ),
        compiler_params=pltpu.CompilerParams(
            dimension_semantics=("parallel", "parallel"),
            vmem_limit_bytes=vmem_limit),
        cost_estimate=proj_cost,
    )(x_p, w_fused, b_fused)

    # ---- kernel 2: flash-style attention + gamma*out + x residual -----------
    attn_cost = pl.CostEstimate(
        flops=2 * B * W_pad * W_pad * (Cqp + Cv),
        transcendentals=B * W_pad * W_pad,
        bytes_accessed=int(B * Cqp * W_pad * c_bytes
                           + nw * B * (Cqp + Cv) * W_pad * c_bytes
                           + 2 * x_total_bytes))
    kernel = functools.partial(
        _attn_kernel, C=C, W=W, needs_mask=needs_mask,
        exp_dtype=compute_dtype, approx_recip=approx_reciprocal)
    out = pl.pallas_call(
        kernel,
        out_shape=jax.ShapeDtypeStruct((B, C, W_pad), x.dtype),
        grid=(B, nw, nw),
        in_specs=[
            pl.BlockSpec((None, Cqp, T), lambda b, qi, kv: (b, 0, qi)),  # q tile
            pl.BlockSpec((None, Cqp, T), lambda b, qi, kv: (b, 0, kv)),  # k tile
            pl.BlockSpec((None, Cv, T), lambda b, qi, kv: (b, 0, kv)),   # v tile (aug)
            pl.BlockSpec((None, C, T), lambda b, qi, kv: (b, 0, qi)),    # x residual
            pl.BlockSpec(memory_space=pltpu.SMEM),                       # gamma scalar
        ],
        out_specs=pl.BlockSpec((None, C, T), lambda b, qi, kv: (b, 0, qi)),
        scratch_shapes=[
            pltpu.VMEM((1, T), jnp.float32),     # running max
            pltpu.VMEM((Cv, T), jnp.float32),    # output rows + denominator row
        ],
        compiler_params=pltpu.CompilerParams(
            dimension_semantics=("parallel", "parallel", "arbitrary"),
            vmem_limit_bytes=vmem_limit),
        cost_estimate=attn_cost,
    )(q_all, k_all, v_all, x_p, gamma1)

    return out[:, :, :W] if needs_mask else out


def self_attn_ref(x, wq, bq, wk, bk, wv, bv, gamma):
    """Pure-JAX reference mirroring the PyTorch forward."""
    q = jnp.einsum("oc,bcw->bow", wq, x) + bq[None, :, None]
    k = jnp.einsum("oc,bcw->bow", wk, x) + bk[None, :, None]
    v = jnp.einsum("oc,bcw->bow", wv, x) + bv[None, :, None]
    energy = jnp.einsum("bci,bcj->bij", q, k)          # (B, W, W)
    attn = jax.nn.softmax(energy, axis=-1)
    out = jnp.einsum("bcj,bij->bci", v, attn)          # (B, C, W)
    return gamma * out + x


def _make_inputs(key, B, C, W):
    Cq = C // 8
    ks = jax.random.split(key, 7)
    x = jax.random.normal(ks[0], (B, C, W), dtype=jnp.float32)
    wq = jax.random.normal(ks[1], (Cq, C), dtype=jnp.float32) * 0.1
    bq = jax.random.normal(ks[2], (Cq,), dtype=jnp.float32) * 0.1
    wk = jax.random.normal(ks[3], (Cq, C), dtype=jnp.float32) * 0.1
    bk = jax.random.normal(ks[4], (Cq,), dtype=jnp.float32) * 0.1
    wv = jax.random.normal(ks[5], (C, C), dtype=jnp.float32) * 0.1
    bv = jax.random.normal(ks[6], (C,), dtype=jnp.float32) * 0.1
    return x, wq, bq, wk, bk, wv, bv


if __name__ == "__main__":
    keys = jax.random.split(jax.random.PRNGKey(0), 3)
    # Module __init__ sets gamma = 0 (out == x); use a nonzero value so the
    # attention path is actually exercised and checked.
    gamma = jnp.array([0.5], dtype=jnp.float32)

    # 1) Small shape matching the module (single tile, no padding), f32.
    args = _make_inputs(keys[0], 2, 32, 16)
    out = jax.block_until_ready(
        self_attn_pallas(*args, gamma, compute_dtype=jnp.float32))
    ref = self_attn_ref(*args, gamma)
    assert out.shape == args[0].shape
    assert jnp.allclose(out, ref, atol=1e-4, rtol=1e-4), "f32 small mismatch"

    # 2) Multi-tile online softmax (W=1024 -> 2x2 tiles of 512), f32.
    args2 = _make_inputs(keys[1], 2, 32, 1024)
    out2 = jax.block_until_ready(
        self_attn_pallas(*args2, gamma, compute_dtype=jnp.float32))
    ref2 = self_attn_ref(*args2, gamma)
    assert jnp.allclose(out2, ref2, atol=1e-4, rtol=1e-4), "f32 tiled mismatch"

    # 3) Padded + masked tail (W=520 -> 5 tiles of 128, 120 masked keys), f32.
    args3 = _make_inputs(keys[2], 1, 32, 520)
    out3 = jax.block_until_ready(
        self_attn_pallas(*args3, gamma, compute_dtype=jnp.float32))
    ref3 = self_attn_ref(*args3, gamma)
    assert out3.shape == args3[0].shape
    assert jnp.allclose(out3, ref3, atol=1e-4, rtol=1e-4), "f32 masked mismatch"

    # 4) Default bf16 MXU/EUP path (f32 accumulation / softmax bookkeeping).
    out4 = jax.block_until_ready(self_attn_pallas(*args2, gamma))
    assert jnp.allclose(out4, ref2, atol=5e-2, rtol=5e-2), "bf16 tiled mismatch"

    print("KERNEL_OK")
</pallas_src>

<mosaic_0001>
module attributes {stable_mosaic.version = 11 : i64} {
  func.func @_proj_kernel(%arg0: i32, %arg1: i32, %arg2: memref<1x32x16xf32, #tpu.memory_space<vmem>>, %arg3: memref<72x32xf32, #tpu.memory_space<vmem>>, %arg4: memref<72x1xf32, #tpu.memory_space<vmem>>, %arg5: memref<1x16x16xf32, #tpu.memory_space<vmem>>, %arg6: memref<1x16x16xf32, #tpu.memory_space<vmem>>, %arg7: memref<1x40x16xf32, #tpu.memory_space<vmem>>) attributes {dimension_semantics = [#tpu.dimension_semantics<parallel>, #tpu.dimension_semantics<parallel>], iteration_bounds = array<i64: 2, 1>, scalar_prefetch = 0 : i64, scratch_operands = 0 : i64, tpu.core_type = #tpu.core_type<tc>, window_params = [{transform_indices = @transform_0, window_bounds = array<i64: 1, 32, 16>}, {pipeline_mode = #tpu.pipeline_mode<synchronous>, transform_indices = @transform_1, window_bounds = array<i64: 72, 32>}, {pipeline_mode = #tpu.pipeline_mode<synchronous>, transform_indices = @transform_2, window_bounds = array<i64: 72, 1>}, {transform_indices = @transform_3, window_bounds = array<i64: 1, 16, 16>}, {transform_indices = @transform_4, window_bounds = array<i64: 1, 16, 16>}, {transform_indices = @transform_5, window_bounds = array<i64: 1, 40, 16>}]} {
    %c0 = arith.constant 0 : index
    %c0_0 = arith.constant 0 : index
    %0 = vector.load %arg3[%c0, %c0_0] : memref<72x32xf32, #tpu.memory_space<vmem>>, vector<72x32xf32>
    %c0_1 = arith.constant 0 : index
    %c0_2 = arith.constant 0 : index
    %c0_3 = arith.constant 0 : index
    %1 = vector.load %arg2[%c0_1, %c0_2, %c0_3] : memref<1x32x16xf32, #tpu.memory_space<vmem>>, vector<1x32x16xf32>
    %2 = vector.shape_cast %1 : vector<1x32x16xf32> to vector<32x16xf32>
    %cst = arith.constant dense<0.000000e+00> : vector<72x16xf32>
    %3 = tpu.matmul %0, %2, %cst {dimension_numbers = #tpu.dot_dimension_numbers<[1], [0], [0], [1], [0, 0, 1, 1], [], []>} : vector<72x32xf32>, vector<32x16xf32>, vector<72x16xf32> -> vector<72x16xf32>
    %c0_4 = arith.constant 0 : index
    %c0_5 = arith.constant 0 : index
    %4 = vector.load %arg4[%c0_4, %c0_5] : memref<72x1xf32, #tpu.memory_space<vmem>>, vector<72x1xf32>
    %5 = vector.broadcast %4 : vector<72x1xf32> to vector<72x16xf32>
    %6 = arith.addf %3, %5 : vector<72x16xf32>
    %7 = vector.extract_strided_slice %6 {offsets = [0, 0], sizes = [16, 16], strides = [1, 1]} : vector<72x16xf32> to vector<16x16xf32>
    %c0_6 = arith.constant 0 : index
    %c0_7 = arith.constant 0 : index
    %c0_8 = arith.constant 0 : index
    %8 = vector.load %arg5[%c0_6, %c0_7, %c0_8] : memref<1x16x16xf32, #tpu.memory_space<vmem>>, vector<1x16x16xf32>
    %9 = vector.shape_cast %8 : vector<1x16x16xf32> to vector<16x16xf32>
    %10 = vector.shape_cast %7 : vector<16x16xf32> to vector<1x16x16xf32>
    tpu.vector_store %arg5[%c0_6, %c0_7, %c0_8], %10 {strides = array<i32>} : memref<1x16x16xf32, #tpu.memory_space<vmem>>, vector<1x16x16xf32>,
    %11 = vector.extract_strided_slice %6 {offsets = [16, 0], sizes = [16, 16], strides = [1, 1]} : vector<72x16xf32> to vector<16x16xf32>
    %c0_9 = arith.constant 0 : index
    %c0_10 = arith.constant 0 : index
    %c0_11 = arith.constant 0 : index
    %12 = vector.load %arg6[%c0_9, %c0_10, %c0_11] : memref<1x16x16xf32, #tpu.memory_space<vmem>>, vector<1x16x16xf32>
    %13 = vector.shape_cast %12 : vector<1x16x16xf32> to vector<16x16xf32>
    %14 = vector.shape_cast %11 : vector<16x16xf32> to vector<1x16x16xf32>
    tpu.vector_store %arg6[%c0_9, %c0_10, %c0_11], %14 {strides = array<i32>} : memref<1x16x16xf32, #tpu.memory_space<vmem>>, vector<1x16x16xf32>,
    %15 = vector.extract_strided_slice %6 {offsets = [32, 0], sizes = [40, 16], strides = [1, 1]} : vector<72x16xf32> to vector<40x16xf32>
    %c0_12 = arith.constant 0 : index
    %c0_13 = arith.constant 0 : index
    %c0_14 = arith.constant 0 : index
    %16 = vector.load %arg7[%c0_12, %c0_13, %c0_14] : memref<1x40x16xf32, #tpu.memory_space<vmem>>, vector<1x40x16xf32>
    %17 = vector.shape_cast %16 : vector<1x40x16xf32> to vector<40x16xf32>
    %18 = vector.shape_cast %15 : vector<40x16xf32> to vector<1x40x16xf32>
    tpu.vector_store %arg7[%c0_12, %c0_13, %c0_14], %18 {strides = array<i32>} : memref<1x40x16xf32, #tpu.memory_space<vmem>>, vector<1x40x16xf32>,
    return
  }
  func.func @transform_0(%arg0: i32, %arg1: i32) -> (i32, i32, i32) {
    %c0_i32 = arith.constant 0 : i32
    %c0_i32_0 = arith.constant 0 : i32
    return %arg0, %c0_i32, %arg1 : i32, i32, i32
  }
  func.func @transform_1(%arg0: i32, %arg1: i32) -> (i32, i32) {
    %c0_i32 = arith.constant 0 : i32
    %c0_i32_0 = arith.constant 0 : i32
    %c0_i32_1 = arith.constant 0 : i32
    return %c0_i32, %c0_i32_0 : i32, i32
  }
  func.func @transform_2(%arg0: i32, %arg1: i32) -> (i32, i32) {
    %c0_i32 = arith.constant 0 : i32
    %c0_i32_0 = arith.constant 0 : i32
    %c0_i32_1 = arith.constant 0 : i32
    return %c0_i32, %c0_i32_0 : i32, i32
  }
  func.func @transform_3(%arg0: i32, %arg1: i32) -> (i32, i32, i32) {
    %c0_i32 = arith.constant 0 : i32
    %c0_i32_0 = arith.constant 0 : i32
    return %arg0, %c0_i32, %arg1 : i32, i32, i32
  }
  func.func @transform_4(%arg0: i32, %arg1: i32) -> (i32, i32, i32) {
    %c0_i32 = arith.constant 0 : i32
    %c0_i32_0 = arith.constant 0 : i32
    return %arg0, %c0_i32, %arg1 : i32, i32, i32
  }
  func.func @transform_5(%arg0: i32, %arg1: i32) -> (i32, i32, i32) {
    %c0_i32 = arith.constant 0 : i32
    %c0_i32_0 = arith.constant 0 : i32
    return %arg0, %c0_i32, %arg1 : i32, i32, i32
  }
}

</mosaic_0001>

<llo_original>
// kernel: tpu_custom_call.1
$region0: #{tpu_custom_call.1}
  #allocation0 [shape = 'u32[]', space=smem, size = 0x4, offset = 0x4, fixed_abs, tag = 'smem constant byte address 0x4 - core index']
  #allocation1 [shape = 'u32[144,128]{1,0:T(1,128)}', space=vmem, size = 0x12000, scoped, tag = 'internal scratch']
  %s0 = inlined_call_operand.vmem [shape: f32[2,32,16], index: 0, kind: input, shape index: {}]
  %s1 = inlined_call_operand.vmem [shape: f32[72,32], index: 1, kind: input, shape index: {}]
  %s2 = inlined_call_operand.vmem [shape: f32[72,1], index: 2, kind: input, shape index: {}]
  %s3 = inlined_call_operand.hbm [shape: f32[2,16,16], index: 3, kind: output, shape index: {0}]
  %s4 = inlined_call_operand.hbm [shape: f32[2,16,16], index: 4, kind: output, shape index: {1}]
  %s5 = inlined_call_operand.vmem [shape: f32[2,40,16], index: 5, kind: output, shape index: {2}]
  %6 = xla_tuple %s3, %s4, %s5
  %s7 = sld [smem:[#allocation0]]
  $region61: #{tpu_custom_call.1} parent=0
    _
  %s9 = ssub.s32 1, %s7
  %s10 = scalar_select 0, %s9, %s7
  $region1: #{tpu_custom_call.1} parent=0
    #allocation2 [shape = 'u8[16384]{0}', space=vmem, size = 0x4000, scoped, tag = 'output window, operand 0']
    #allocation3 [shape = 's32[2]{0}', space=sflag, size = 0x8, scoped, tag = 'scoped memory for tpu_custom_call.1']
    #allocation4 [shape = 'u8[16384]{0}', space=vmem, size = 0x4000, scoped, tag = 'output window, operand 1']
    #allocation5 [shape = 's32[2]{0}', space=sflag, size = 0x8, scoped, tag = 'scoped memory for tpu_custom_call.1']
    %11 = vsyncpa [#allocation3], 0
    %s12 = scalar_lea.sflag [#allocation3], 1
    %13 = vsyncpa %s12, 0
    %14 = vsyncpa [#allocation5], 0
    %s15 = scalar_lea.sflag [#allocation5], 1
    %16 = vsyncpa %s15, 0
    loop: start=0, step=1, limit=4
    $region2: #{tpu_custom_call.1} parent=1 // loop_pre_header
      _
    $region3: #{tpu_custom_call.1} parent=1 // loop_header
      %s18 = sphi 0, %s22
      %p19 = scmp.ge.s32.totalorder %s18, 4
      %s25 = sphi 0, %s37
      %s26 = sphi 0, %s33
      %s27 = sphi 0, %s25
      %s28 = sphi 0, %s26
      %s29 = sphi 0, %s27
      %s30 = sphi 0, %s28
      %s42 = sphi 0, %s44
      %s45 = sphi 0, %s42
      %s46 = sphi 0, %s45
      %s62 = sphi 0, %s46
      %s66 = sphi 0, %s66
      %s68 = sphi 0, %s66
      %s69 = sphi 0, %s68
      %s83 = sphi 0, %s69
      %s87 = sphi 0, %s87
      %s89 = sphi 0, %s87
      %s90 = sphi 0, %s89
      %s104 = sphi 0, %s90
      %s112 = sphi 0, %s114
      %s115 = sphi 0, %s112
      %s116 = sphi 0, %s115
      %s132 = sphi 0, %s116
      %s140 = sphi 0, %s142
      %s143 = sphi 0, %s140
      %s144 = sphi 0, %s143
      %s160 = sphi 0, %s144
      %s168 = sphi 0, %s170
      %s171 = sphi 0, %s168
      %s172 = sphi 0, %s171
      %s188 = sphi 0, %s172
    $region4: #{tpu_custom_call.1} parent=1 // loop_header_branch
      %21 = sbr.rel (%p19) target = $region8
    $region5: #{tpu_custom_call.1} parent=1 // loop_body
      %s23 = ssub.s32 %s18, 1
      %s24 = ssub.s32 %s18, 2
      %s31 = sadd.s32 1, %s26
      %p32 = scmp.ge.s32.totalorder %s31, 1
      %s33 = scalar_select %p32, 0, %s31
      %s34 = sadd.s32 1, %s25
      %s35 = scalar_select %p32, %s34, %s25
      %p36 = scmp.ge.s32.totalorder %s35, 2
      %s37 = scalar_select %p36, 0, %s35
      %s38 = ssub.s32 %s25, %s37
      %s39 = ssub.s32 %s26, %s33
      %s40 = sor.u32 %s38, %s39
      %p41 = scmp.eq.s32.totalorder %s40, 0
      %s43 = sadd.s32 %s42, 1
      %s44 = scalar_select %p41, %s42, %s43
      %p47 = pneg %p41
      %p48 = scmp.eq.s32.totalorder %s18, 1
      %p49 = por %p47, %p48
      %p50 = scmp.ne.s32.totalorder %s42, %s45
      %p51 = scmp.eq.s32.totalorder %s18, 0
      %p52 = por %p50, %p51
      %p53 = scmp.ne.s32.totalorder %s42, %s45
      %p54 = scmp.eq.s32.totalorder %s23, 1
      %p55 = por %p53, %p54
      %p56 = scmp.ne.s32.totalorder %s45, %s46
      %p57 = scmp.eq.s32.totalorder %s23, 0
      %p58 = por %p56, %p57
      %p59 = scmp.ne.s32.totalorder %s45, %s46
      %p60 = scmp.eq.s32.totalorder %s24, 1
      %p61 = por %p59, %p60
      %p63 = scmp.ne.s32.totalorder %s46, %s62
      %p64 = scmp.eq.s32.totalorder %s24, 0
      %p65 = por %p63, %p64
      %s67 = sadd.s32 %s66, 1
      %p70 = scmp.eq.s32.totalorder %s18, 1
      %p71 = scmp.ne.s32.totalorder %s66, %s68
      %p72 = scmp.eq.s32.totalorder %s18, 0
      %p73 = por %p71, %p72
      %p74 = scmp.ne.s32.totalorder %s66, %s68
      %p75 = scmp.eq.s32.totalorder %s23, 1
      %p76 = por %p74, %p75
      %p77 = scmp.ne.s32.totalorder %s68, %s69
      %p78 = scmp.eq.s32.totalorder %s23, 0
      %p79 = por %p77, %p78
      %p80 = scmp.ne.s32.totalorder %s68, %s69
      %p81 = scmp.eq.s32.totalorder %s24, 1
      %p82 = por %p80, %p81
      %p84 = scmp.ne.s32.totalorder %s69, %s83
      %p85 = scmp.eq.s32.totalorder %s24, 0
      %p86 = por %p84, %p85
      %s88 = sadd.s32 %s87, 1
      %p91 = scmp.eq.s32.totalorder %s18, 1
      %p92 = scmp.ne.s32.totalorder %s87, %s89
      %p93 = scmp.eq.s32.totalorder %s18, 0
      %p94 = por %p92, %p93
      %p95 = scmp.ne.s32.totalorder %s87, %s89
      %p96 = scmp.eq.s32.totalorder %s23, 1
      %p97 = por %p95, %p96
      %p98 = scmp.ne.s32.totalorder %s89, %s90
      %p99 = scmp.eq.s32.totalorder %s23, 0
      %p100 = por %p98, %p99
      %p101 = scmp.ne.s32.totalorder %s89, %s90
      %p102 = scmp.eq.s32.totalorder %s24, 1
      %p103 = por %p101, %p102
      %p105 = scmp.ne.s32.totalorder %s90, %s104
      %p106 = scmp.eq.s32.totalorder %s24, 0
      %p107 = por %p105, %p106
      %s108 = ssub.s32 %s25, %s37
      %s109 = ssub.s32 %s26, %s33
      %s110 = sor.u32 %s108, %s109
      %p111 = scmp.eq.s32.totalorder %s110, 0
      %s113 = sadd.s32 %s112, 1
      %s114 = scalar_select %p111, %s112, %s113
      %p117 = pneg %p111
      %p118 = scmp.eq.s32.totalorder %s18, 1
      %p119 = por %p117, %p118
      %p120 = scmp.ne.s32.totalorder %s112, %s115
      %p121 = scmp.eq.s32.totalorder %s18, 0
      %p122 = por %p120, %p121
      %p123 = scmp.ne.s32.totalorder %s112, %s115
      %p124 = scmp.eq.s32.totalorder %s23, 1
      %p125 = por %p123, %p124
      %p126 = scmp.ne.s32.totalorder %s115, %s116
      %p127 = scmp.eq.s32.totalorder %s23, 0
      %p128 = por %p126, %p127
      %p129 = scmp.ne.s32.totalorder %s115, %s116
      %p130 = scmp.eq.s32.totalorder %s24, 1
      %p131 = por %p129, %p130
      %p133 = scmp.ne.s32.totalorder %s116, %s132
      %p134 = scmp.eq.s32.totalorder %s24, 0
      %p135 = por %p133, %p134
      %s136 = ssub.s32 %s25, %s37
      %s137 = ssub.s32 %s26, %s33
      %s138 = sor.u32 %s136, %s137
      %p139 = scmp.eq.s32.totalorder %s138, 0
      %s141 = sadd.s32 %s140, 1
      %s142 = scalar_select %p139, %s140, %s141
      %p145 = pneg %p139
      %p146 = scmp.eq.s32.totalorder %s18, 1
      %p147 = por %p145, %p146
      %p148 = scmp.ne.s32.totalorder %s140, %s143
      %p149 = scmp.eq.s32.totalorder %s18, 0
      %p150 = por %p148, %p149
      %p151 = scmp.ne.s32.totalorder %s140, %s143
      %p152 = scmp.eq.s32.totalorder %s23, 1
      %p153 = por %p151, %p152
      %p154 = scmp.ne.s32.totalorder %s143, %s144
      %p155 = scmp.eq.s32.totalorder %s23, 0
      %p156 = por %p154, %p155
      %p157 = scmp.ne.s32.totalorder %s143, %s144
      %p158 = scmp.eq.s32.totalorder %s24, 1
      %p159 = por %p157, %p158
      %p161 = scmp.ne.s32.totalorder %s144, %s160
      %p162 = scmp.eq.s32.totalorder %s24, 0
      %p163 = por %p161, %p162
      %s164 = ssub.s32 %s25, %s37
      %s165 = ssub.s32 %s26, %s33
      %s166 = sor.u32 %s164, %s165
      %p167 = scmp.eq.s32.totalorder %s166, 0
      %s169 = sadd.s32 %s168, 1
      %s170 = scalar_select %p167, %s168, %s169
      %p173 = pneg %p167
      %p174 = scmp.eq.s32.totalorder %s18, 1
      %p175 = por %p173, %p174
      %p176 = scmp.ne.s32.totalorder %s168, %s171
      %p177 = scmp.eq.s32.totalorder %s18, 0
      %p178 = por %p176, %p177
      %p179 = scmp.ne.s32.totalorder %s168, %s171
      %p180 = scmp.eq.s32.totalorder %s23, 1
      %p181 = por %p179, %p180
      %p182 = scmp.ne.s32.totalorder %s171, %s172
      %p183 = scmp.eq.s32.totalorder %s23, 0
      %p184 = por %p182, %p183
      %p185 = scmp.ne.s32.totalorder %s171, %s172
      %p186 = scmp.eq.s32.totalorder %s24, 1
      %p187 = por %p185, %p186
      %p189 = scmp.ne.s32.totalorder %s172, %s188
      %p190 = scmp.eq.s32.totalorder %s24, 0
      %p191 = por %p189, %p190
      %p192 = scmp.le.s32.totalorder 1, %s18
      %p193 = scmp.lt.s32.totalorder %s18, 3
      %p194 = pnand %p192, %p193
      %p195 = pneg %p194
      // Predicated region
      $region9: #{tpu_custom_call.1} parent=5 // pred_check
        _
      $region10: #{tpu_custom_call.1} parent=5 // pred_check_branch
        %197 = sbr.rel (%p194) target = $region12
      $region11: #{tpu_custom_call.1} parent=5 // pred_region
        %s198 = ssub.s32 %s18, 1
        // Predicated region
        $region13: #{tpu_custom_call.1} parent=11 // pred_check
          %p199 = pneg %p79
        $region14: #{tpu_custom_call.1} parent=11 // pred_check_branch
          %201 = sbr.rel (%p199) target = $region16
        $region15: #{tpu_custom_call.1} parent=11 // pred_region
          _
        $region16: #{tpu_custom_call.1} parent=11 // pred_fallthru
          _
        // Predicated region
        $region17: #{tpu_custom_call.1} parent=11 // pred_check
          %p202 = pneg %p100
        $region18: #{tpu_custom_call.1} parent=11 // pred_check_branch
          %204 = sbr.rel (%p202) target = $region20
        $region19: #{tpu_custom_call.1} parent=11 // pred_region
          _
        $region20: #{tpu_custom_call.1} parent=11 // pred_fallthru
          _
      $region12: #{tpu_custom_call.1} parent=5 // pred_fallthru
        _
      %p205 = scmp.lt.s32.totalorder %s18, 2
      // Predicated region
      $region21: #{tpu_custom_call.1} parent=5 // pred_check
        %p206 = pneg %p205
      $region22: #{tpu_custom_call.1} parent=5 // pred_check_branch
        %208 = sbr.rel (%p206) target = $region24
      $region23: #{tpu_custom_call.1} parent=5 // pred_region
        // Predicated region
        $region25: #{tpu_custom_call.1} parent=23 // pred_check
          %p209 = pneg %p52
        $region26: #{tpu_custom_call.1} parent=23 // pred_check_branch
          %211 = sbr.rel (%p209) target = $region28
        $region27: #{tpu_custom_call.1} parent=23 // pred_region
          %p212 = scmp.lt.s32.totalorder %s25, 1
          %s213 = scalar_select %p212, %s25, 1
          %p214 = scmp.lt.s32.totalorder %s26, 0
          %s215 = scalar_select %p214, %s26, 0
          %s216 = smul.addr %s213, 4
          %s217 = sadd.s32 %s215, %s216
          %s218 = smul.addr %s217, 8
          %s219 = scalar_lea.vmem %s0, %s218
        $region28: #{tpu_custom_call.1} parent=23 // pred_fallthru
          _
      $region24: #{tpu_custom_call.1} parent=5 // pred_fallthru
        _
      %p220 = scmp.le.s32.totalorder 1, %s18
      %p221 = scmp.lt.s32.totalorder %s18, 3
      %p222 = pnand %p220, %p221
      %p223 = pneg %p222
      // Predicated region
      $region29: #{tpu_custom_call.1} parent=5 // pred_check
        _
      $region30: #{tpu_custom_call.1} parent=5 // pred_check_branch
        %225 = sbr.rel (%p222) target = $region32
      $region31: #{tpu_custom_call.1} parent=5 // pred_region
        %s226 = ssub.s32 %s18, 1
        %p227 = scmp.lt.s32.totalorder %s27, 1
        %s228 = scalar_select %p227, %s27, 1
        %p229 = scmp.lt.s32.totalorder %s28, 0
        %s230 = scalar_select %p229, %s28, 0
        %s231 = smul.addr %s228, 4
        %s232 = sadd.s32 %s230, %s231
        %s233 = smul.addr %s232, 8
        %s234 = scalar_lea.vmem %s0, %s233
        %p235 = pneg %p58
        %p236 = pneg %p55
        %p237 = pneg %p79
        %p238 = pneg %p76
        %p239 = pneg %p100
        %p240 = pneg %p97
        %p241 = pneg %p128
        %p242 = pneg %p125
        %s243 = sand.u32 %s115, 1
        %s244 = scalar_lea.sflag [#allocation3], %s243
        %s245 = sand.u32 %s115, 1
        %s246 = smul.addr %s245, 16
        %s247 = scalar_lea.vmem [#allocation2], %s246
        %p248 = pneg %p156
        %p249 = pneg %p153
        %s250 = sand.u32 %s143, 1
        %s251 = scalar_lea.sflag [#allocation5], %s250
        %s252 = sand.u32 %s143, 1
        %s253 = smul.addr %s252, 16
        %s254 = scalar_lea.vmem [#allocation4], %s253
        %p255 = pneg %p184
        %p256 = pneg %p181
        %p257 = scmp.lt.s32.totalorder %s27, 1
        %s258 = scalar_select %p257, %s27, 1
        %p259 = scmp.lt.s32.totalorder %s28, 0
        %s260 = scalar_select %p259, %s28, 0
        %s261 = smul.addr %s258, 5
        %s262 = sadd.s32 %s260, %s261
        %s263 = smul.addr %s262, 8
        %s264 = scalar_lea.vmem %s5, %s263
        %p265 = scmp.lt.s32.totalorder %s27, 1
        %s266 = scalar_select %p265, %s27, 1
        %p267 = scmp.lt.s32.totalorder %s28, 0
        %s268 = scalar_select %p267, %s28, 0
        %s269 = smul.addr %s266, 4
        %s270 = sadd.s32 %s268, %s269
        %s271 = smul.addr %s270, 8
        %s272 = scalar_lea.vmem %s0, %s271
        %p273 = scmp.lt.s32.totalorder %s27, 1
        %s274 = scalar_select %p273, %s27, 1
        %p275 = scmp.lt.s32.totalorder %s28, 0
        %s276 = scalar_select %p275, %s28, 0
        %s277 = smul.addr %s274, 5
        %s278 = sadd.s32 %s276, %s277
        %s279 = smul.addr %s278, 8
        %s280 = scalar_lea.vmem %s5, %s279
        %v281 = vld [vmem:[%s1] sm:$0xff]
        %v282 = vld [vmem:[%s1 + $0x8] sm:$0xff]
        %v283 = vld [vmem:[%s1 + $0x10] sm:$0xff]
        %v284 = vld [vmem:[%s1 + $0x18] sm:$0xff]
        %v285 = vld [vmem:[%s1 + $0x20] sm:$0xff]
        %v286 = vld [vmem:[%s1 + $0x28] sm:$0xff]
        %v287 = vld [vmem:[%s1 + $0x30] sm:$0xff]
        %v288 = vld [vmem:[%s1 + $0x38] sm:$0xff]
        %v289 = vld [vmem:[%s1 + $0x40] sm:$0xff]
        %v290 = vld [vmem:[%s272] sm:$0xff]
        %v291 = vld [vmem:[%s272 + $0x8] sm:$0xff]
        %v292 = vld [vmem:[%s272 + $0x10] sm:$0xff]
        %v293 = vld [vmem:[%s272 + $0x18] sm:$0xff]
        %v294 = vld [vmem:[%s2] sm:$0xff]
        %v295 = vld [vmem:[%s2 + $0x8] sm:$0xff]
        %v296 = vld [vmem:[%s2 + $0x10] sm:$0xff]
        %v297 = vld [vmem:[%s2 + $0x18] sm:$0xff]
        %v298 = vld [vmem:[%s2 + $0x20] sm:$0xff]
        %v299 = vld [vmem:[%s2 + $0x28] sm:$0xff]
        %v300 = vld [vmem:[%s2 + $0x30] sm:$0xff]
        %v301 = vld [vmem:[%s2 + $0x38] sm:$0xff]
        %v302 = vld [vmem:[%s2 + $0x40] sm:$0xff]
        %304 = vset.pattern.permute.xlu0 0
        %305 = vperm.xlu0 %304, %v294
        %v306 = vpop.permute.xlu0 %305
        %309 = vset.pattern.permute.xlu0 0
        %310 = vperm.xlu0 %309, %v295
        %v311 = vpop.permute.xlu0 %310
        %314 = vset.pattern.permute.xlu0 0
        %315 = vperm.xlu0 %314, %v296
        %v316 = vpop.permute.xlu0 %315
        %319 = vset.pattern.permute.xlu0 0
        %320 = vperm.xlu0 %319, %v297
        %v321 = vpop.permute.xlu0 %320
        %324 = vset.pattern.permute.xlu0 0
        %325 = vperm.xlu0 %324, %v298
        %v326 = vpop.permute.xlu0 %325
        %329 = vset.pattern.permute.xlu0 0
        %330 = vperm.xlu0 %329, %v299
        %v331 = vpop.permute.xlu0 %330
        %334 = vset.pattern.permute.xlu0 0
        %335 = vperm.xlu0 %334, %v300
        %v336 = vpop.permute.xlu0 %335
        %339 = vset.pattern.permute.xlu0 0
        %340 = vperm.xlu0 %339, %v301
        %v341 = vpop.permute.xlu0 %340
        %344 = vset.pattern.permute.xlu0 0
        %345 = vperm.xlu0 %344, %v302
        %v346 = vpop.permute.xlu0 %345
        %vm348 = vcmask 261120
        %v350 = vsel %vm348, %v281, 0
        %v353 = vsel %vm348, %v282, 0
        %v356 = vsel %vm348, %v283, 0
        %v359 = vsel %vm348, %v284, 0
        %v362 = vsel %vm348, %v285, 0
        %v365 = vsel %vm348, %v286, 0
        %v368 = vsel %vm348, %v287, 0
        %v371 = vsel %vm348, %v288, 0
        %v374 = vsel %vm348, %v289, 0
        %376 = vmatprep.subr.mxu0 0.0
        %377 = vmatpush1.msra.mxu0 %v290
        %378 = vmatprep.subr.mxu0 0.0
        %379 = vmatpush1.msra.mxu0 %v291
        %380 = vmatprep.subr.mxu0 0.0
        %381 = vmatpush1.msra.mxu0 %v292
        %382 = vmatprep.subr.mxu0 0.0
        %383 = vmatpush1.msra.mxu0 %v293
        %384 = vmatprep.subr.mxu0 0.0
        %385 = vmatpush1.msra.mxu0 0.0
        %386 = vmatprep.subr.mxu0 0.0
        %387 = vmatpush1.msra.mxu0 0.0
        %388 = vmatprep.subr.mxu0 0.0
        %389 = vmatpush1.msra.mxu0 0.0
        %390 = vmatprep.subr.mxu0 0.0
        %391 = vmatpush1.msra.mxu0 0.0
        %392 = vmatprep.subr.mxu0 0.0
        %393 = vmatpush1.msra.mxu0 0.0
        %394 = vmatprep.subr.mxu0 0.0
        %395 = vmatpush1.msra.mxu0 0.0
        %396 = vmatprep.subr.mxu0 0.0
        %397 = vmatpush1.msra.mxu0 0.0
        %398 = vmatprep.subr.mxu0 0.0
        %399 = vmatpush1.msra.mxu0 0.0
        %400 = vmatprep.subr.mxu0 0.0
        %401 = vmatpush1.msra.mxu0 0.0
        %402 = vmatprep.subr.mxu0 0.0
        %403 = vmatpush1.msra.mxu0 0.0
        %404 = vmatprep.subr.mxu0 0.0
        %405 = vmatpush1.msra.mxu0 0.0
        %406 = vmatprep.subr.mxu0 0.0
        %407 = vmatpush1.msra.mxu0 0.0
        %408 = vmatprep.subr.mxu0 0.0
        %409 = vmatpush1.msra.mxu0 0.0
        %410 = vmatprep.subr.mxu0 0.0
        %411 = vmatpush1.msra.mxu0 0.0
        %412 = vmatprep.subr.mxu0 0.0
        %413 = vmatpush1.msra.mxu0 0.0
        %414 = vmatprep.subr.mxu0 0.0
        %415 = vmatpush1.msra.mxu0 0.0
        %416 = vmatprep.subr.mxu0 0.0
        %417 = vmatpush1.msra.mxu0 0.0
        %418 = vmatprep.subr.mxu0 0.0
        %419 = vmatpush1.msra.mxu0 0.0
        %420 = vmatprep.subr.mxu0 0.0
        %421 = vmatpush1.msra.mxu0 0.0
        %422 = vmatprep.subr.mxu0 0.0
        %423 = vmatpush1.msra.mxu0 0.0
        %424 = vmatprep.subr.mxu0 0.0
        %425 = vmatpush1.msra.mxu0 0.0
        %426 = vmatprep.subr.mxu0 0.0
        %427 = vmatpush1.msra.mxu0 0.0
        %428 = vmatprep.subr.mxu0 0.0
        %429 = vmatpush1.msra.mxu0 0.0
        %430 = vmatprep.subr.mxu0 0.0
        %431 = vmatpush1.msra.mxu0 0.0
        %432 = vmatprep.subr.mxu0 0.0
        %433 = vmatpush1.msra.mxu0 0.0
        %434 = vmatprep.subr.mxu0 0.0
        %435 = vmatpush1.msra.mxu0 0.0
        %436 = vmatprep.subr.mxu0 0.0
        %437 = vmatpush1.msra.mxu0 0.0
        %438 = vmatprep.subr.mxu0 0.0
        %439 = vmatpush1.msra.mxu0 0.0
        %440 = vmatprep.mubr.f32.mxu0 0.0
        %441 = vmatmul.mubr.f32.gmra.mrb[0].mxu0 %v350
        %v442 = vpop.f32.mrb[0].mxu0
        %v443 = vadd.f32 %v306, %v442
        %v444 = vpop.f32.mrb[0].mxu0
        %445 = vmatprep.mubr.f32.mxu0 0.0
        %446 = vmatmul.mubr.f32.gmra.mrb[0].mxu0 %v353
        %v447 = vpop.f32.mrb[0].mxu0
        %v448 = vadd.f32 %v311, %v447
        %v449 = vpop.f32.mrb[0].mxu0
        %450 = vmatprep.mubr.f32.mxu0 0.0
        %451 = vmatmul.mubr.f32.gmra.mrb[0].mxu0 %v356
        %v452 = vpop.f32.mrb[0].mxu0
        %v453 = vadd.f32 %v316, %v452
        %v454 = vpop.f32.mrb[0].mxu0
        %455 = vmatprep.mubr.f32.mxu0 0.0
        %456 = vmatmul.mubr.f32.gmra.mrb[0].mxu0 %v359
        %v457 = vpop.f32.mrb[0].mxu0
        %v458 = vadd.f32 %v321, %v457
        %v459 = vpop.f32.mrb[0].mxu0
        %460 = vmatprep.mubr.f32.mxu0 0.0
        %461 = vmatmul.mubr.f32.gmra.mrb[0].mxu0 %v362
        %v462 = vpop.f32.mrb[0].mxu0
        %v463 = vadd.f32 %v326, %v462
        %v464 = vpop.f32.mrb[0].mxu0
        %465 = vmatprep.mubr.f32.mxu0 0.0
        %466 = vmatmul.mubr.f32.gmra.mrb[0].mxu0 %v365
        %v467 = vpop.f32.mrb[0].mxu0
        %v468 = vadd.f32 %v331, %v467
        %v469 = vpop.f32.mrb[0].mxu0
        %470 = vmatprep.mubr.f32.mxu0 0.0
        %471 = vmatmul.mubr.f32.gmra.mrb[0].mxu0 %v368
        %v472 = vpop.f32.mrb[0].mxu0
        %v473 = vadd.f32 %v336, %v472
        %v474 = vpop.f32.mrb[0].mxu0
        %475 = vmatprep.mubr.f32.mxu0 0.0
        %476 = vmatmul.mubr.f32.gmra.mrb[0].mxu0 %v371
        %v477 = vpop.f32.mrb[0].mxu0
        %v478 = vadd.f32 %v341, %v477
        %v479 = vpop.f32.mrb[0].mxu0
        %480 = vmatprep.mubr.f32.mxu0 0.0
        %481 = vmatmul.mubr.f32.gmra.mrb[0].mxu0 %v374
        %v482 = vpop.f32.mrb[0].mxu0
        %v483 = vadd.f32 %v346, %v482
        %v484 = vpop.f32.mrb[0].mxu0
        %485 = vdwg.mxu0
        %vm486 = vcmask 130048
        %487 = vst.msk [vmem:[%s247] sm:$0xff] %vm486, %v443
        %488 = vst.msk [vmem:[%s247 + $0x8] sm:$0xff] %vm486, %v448
        %489 = vst.msk [vmem:[%s254] sm:$0xff] %vm486, %v453
        %490 = vst.msk [vmem:[%s254 + $0x8] sm:$0xff] %vm486, %v458
        %491 = vst.msk [vmem:[%s280] sm:$0xff] %vm486, %v463
        %492 = vst.msk [vmem:[%s280 + $0x8] sm:$0xff] %vm486, %v468
        %493 = vst.msk [vmem:[%s280 + $0x10] sm:$0xff] %vm486, %v473
        %494 = vst.msk [vmem:[%s280 + $0x18] sm:$0xff] %vm486, %v478
        %495 = vst.msk [vmem:[%s280 + $0x20] sm:$0xff] %vm486, %v483
        %s496 = sand.u32 %s115, 1
        %s497 = scalar_lea.sflag [#allocation3], %s496
        %s498 = sand.u32 %s115, 1
        %s499 = smul.addr %s498, 16
        %s500 = scalar_lea.vmem [#allocation2], %s499
        %s501 = sand.u32 %s143, 1
        %s502 = scalar_lea.sflag [#allocation5], %s501
        %s503 = sand.u32 %s143, 1
        %s504 = smul.addr %s503, 16
        %s505 = scalar_lea.vmem [#allocation4], %s504
        %p506 = scmp.lt.s32.totalorder %s27, 1
        %s507 = scalar_select %p506, %s27, 1
        %p508 = scmp.lt.s32.totalorder %s28, 0
        %s509 = scalar_select %p508, %s28, 0
        %s510 = smul.addr %s507, 5
        %s511 = sadd.s32 %s509, %s510
        %s512 = smul.addr %s511, 8
        %s513 = scalar_lea.vmem %s5, %s512
        // Predicated region
        $region33: #{tpu_custom_call.1} parent=31 // pred_check
          %p514 = pneg %p125
        $region34: #{tpu_custom_call.1} parent=31 // pred_check_branch
          %516 = sbr.rel (%p514) target = $region36
        $region35: #{tpu_custom_call.1} parent=31 // pred_region
          %s518 = ssub.s32 256, 256
          %519 = vsyncadd %s497, %s518
          %s520 = smul.addr %s27, 2
          %s521 = sadd.s32 %s28, %s520
          %s522 = smul.addr %s521, 128
          %s523 = scalar_lea.hbm %s3, %s522
          %s524 = sshll.u32 %s500, 4
          %s525 = int_to_ptr.vmem [resolvable:$true] %s524
          %530 = dma.vmem_to_hbm [thread:$0]  %s525, 256, %s523, %s497, 128, 128, 8
        $region36: #{tpu_custom_call.1} parent=31 // pred_fallthru
          _
        // Predicated region
        $region37: #{tpu_custom_call.1} parent=31 // pred_check
          %p531 = pneg %p153
        $region38: #{tpu_custom_call.1} parent=31 // pred_check_branch
          %533 = sbr.rel (%p531) target = $region40
        $region39: #{tpu_custom_call.1} parent=31 // pred_region
          %s535 = ssub.s32 256, 256
          %536 = vsyncadd %s502, %s535
          %s537 = smul.addr %s27, 2
          %s538 = sadd.s32 %s28, %s537
          %s539 = smul.addr %s538, 128
          %s540 = scalar_lea.hbm %s4, %s539
          %s541 = sshll.u32 %s505, 4
          %s542 = int_to_ptr.vmem [resolvable:$true] %s541
          %547 = dma.vmem_to_hbm [thread:$0]  %s542, 256, %s540, %s502, 128, 128, 8
        $region40: #{tpu_custom_call.1} parent=31 // pred_fallthru
          _
        // Predicated region
        $region41: #{tpu_custom_call.1} parent=31 // pred_check
          %p548 = pneg %p181
        $region42: #{tpu_custom_call.1} parent=31 // pred_check_branch
          %550 = sbr.rel (%p548) target = $region44
        $region43: #{tpu_custom_call.1} parent=31 // pred_region
          _
        $region44: #{tpu_custom_call.1} parent=31 // pred_fallthru
          _
      $region32: #{tpu_custom_call.1} parent=5 // pred_fallthru
        _
      %p551 = scmp.le.s32.totalorder 2, %s18
      // Predicated region
      $region45: #{tpu_custom_call.1} parent=5 // pred_check
        %p552 = pneg %p551
      $region46: #{tpu_custom_call.1} parent=5 // pred_check_branch
        %554 = sbr.rel (%p552) target = $region48
      $region47: #{tpu_custom_call.1} parent=5 // pred_region
        %s555 = ssub.s32 %s18, 2
        // Predicated region
        $region49: #{tpu_custom_call.1} parent=47 // pred_check
          %p556 = pneg %p131
        $region50: #{tpu_custom_call.1} parent=47 // pred_check_branch
          %558 = sbr.rel (%p556) target = $region52
        $region51: #{tpu_custom_call.1} parent=47 // pred_region
          %s559 = sand.u32 %s116, 1
          %s560 = scalar_lea.sflag [#allocation3], %s559
          %s561 = sand.u32 %s116, 1
          %s562 = smul.addr %s561, 16
          %s563 = scalar_lea.vmem [#allocation2], %s562
          %564 = dma.done %s560, 256
        $region52: #{tpu_custom_call.1} parent=47 // pred_fallthru
          _
        // Predicated region
        $region53: #{tpu_custom_call.1} parent=47 // pred_check
          %p565 = pneg %p159
        $region54: #{tpu_custom_call.1} parent=47 // pred_check_branch
          %567 = sbr.rel (%p565) target = $region56
        $region55: #{tpu_custom_call.1} parent=47 // pred_region
          %s568 = sand.u32 %s144, 1
          %s569 = scalar_lea.sflag [#allocation5], %s568
          %s570 = sand.u32 %s144, 1
          %s571 = smul.addr %s570, 16
          %s572 = scalar_lea.vmem [#allocation4], %s571
          %573 = dma.done %s569, 256
        $region56: #{tpu_custom_call.1} parent=47 // pred_fallthru
          _
        // Predicated region
        $region57: #{tpu_custom_call.1} parent=47 // pred_check
          %p574 = pneg %p187
        $region58: #{tpu_custom_call.1} parent=47 // pred_check_branch
          %576 = sbr.rel (%p574) target = $region60
        $region59: #{tpu_custom_call.1} parent=47 // pred_region
          %p577 = scmp.lt.s32.totalorder %s29, 1
          %s578 = scalar_select %p577, %s29, 1
          %p579 = scmp.lt.s32.totalorder %s30, 0
          %s580 = scalar_select %p579, %s30, 0
          %s581 = smul.addr %s578, 5
          %s582 = sadd.s32 %s580, %s581
          %s583 = smul.addr %s582, 8
          %s584 = scalar_lea.vmem %s5, %s583
        $region60: #{tpu_custom_call.1} parent=47 // pred_fallthru
          _
      $region48: #{tpu_custom_call.1} parent=5 // pred_fallthru
        _
    $region6: #{tpu_custom_call.1} parent=1 // loop_footer
      %s22 = sadd.s32 1, %s18
    $region7: #{tpu_custom_call.1} parent=1 // loop_footer_branch
      %17 = sbr.rel target = $region3
    $region8: #{tpu_custom_call.1} parent=1 // loop_exit
      _
    %585 = vsyncpa [#allocation3], 1
    %s586 = scalar_lea.sflag [#allocation3], 1
    %587 = vsyncpa %s586, 1
    %588 = vsyncpa [#allocation5], 1
    %s589 = scalar_lea.sflag [#allocation5], 1
    %590 = vsyncpa %s589, 1

</llo_original>
